<compile_context>
chip_gen: v7x
topology: tpu7x:2x2x1
jax: 0.10.0
libtpu: 0.0.40
codegen_flags: <defaults>
</compile_context>

<pallas_src>
from functools import partial

import jax
import jax.numpy as jnp
from jax.experimental import pallas as pl
from jax.experimental.pallas import tpu as pltpu


def _lane_fold(x):
    """Reduce (rows, n*128) -> (rows, 128) with lane-aligned VALU adds (no XLU)."""
    n = x.shape[-1] // 128
    carry = None
    while n > 1:
        if n % 2:
            tail = x[:, (n - 1) * 128:]
            carry = tail if carry is None else carry + tail
            x = x[:, :(n - 1) * 128]
            n -= 1
        half = (n // 2) * 128
        x = x[:, :half] + x[:, half:]
        n //= 2
    if carry is not None:
        x = x + carry
    return x


def _dice_bce_kernel(p_ref, t_ref, inter_ref, denom_ref, bce_ref,
                     *, cols, tk, half_blocks, kblocks, need_mask):
    s = pl.program_id(0)   # parallel shard (2 on v7x, else 1)
    k = pl.program_id(1)   # reduction chunk within the shard

    # Init the narrow resident accumulators at the start of each shard's scan.
    @pl.when(k == 0)
    def _():
        inter_ref[...] = jnp.zeros_like(inter_ref)
        denom_ref[...] = jnp.zeros_like(denom_ref)
        bce_ref[...] = jnp.zeros_like(bce_ref)

    p = p_ref[...].astype(jnp.float32)   # (rows, tk)
    t = t_ref[...].astype(jnp.float32)   # (rows, tk)

    # PyTorch F.binary_cross_entropy clamps log terms at -100.
    log_p = jnp.maximum(jnp.log(p), -100.0)
    log_1mp = jnp.maximum(jnp.log(1.0 - p), -100.0)

    def accumulate(mask=None):
        def fold(x):
            if mask is not None:
                x = jnp.where(mask, x, 0.0)
            return _lane_fold(x)
        inter_ref[...] += fold(p * t)
        denom_ref[...] += fold(p + t)
        # Negated BCE contribution; sign + /total applied in the JAX finalize.
        bce_ref[...] += fold(log_1mp + t * (log_p - log_1mp))

    if need_mask:
        logical = s * half_blocks + k
        # Blocks with logical index >= last_full are the partial tail block and/or
        # clamped duplicate blocks (second shard when kblocks is odd).
        last_full = kblocks if cols % tk == 0 else kblocks - 1

        @pl.when(logical < last_full)
        def _():
            accumulate()            # unmasked fast path for interior tiles

        @pl.when(logical >= last_full)
        def _():
            col = logical * tk + jax.lax.broadcasted_iota(jnp.int32, p.shape, 1)
            accumulate(mask=col < cols)
    else:
        accumulate()


def _num_parallel_shards():
    """2-way scan split only on chips with 2 TensorCores sharing the grid (v7x)."""
    try:
        kind = jax.devices()[0].device_kind.lower()
    except Exception:
        return 1
    return 2 if "v7" in kind else 1


@partial(jax.jit, static_argnames=("weight", "tk"))
def dice_bce_loss(inputs, targets, smooth=1.0, weight=(1, 0.5), *, tk=32768):
    """DiceBCELoss.forward: dice_weight * dice_loss + bce_weight * BCE (scalar f32)."""
    if weight is None:
        weight = (1, 1)
    dice_w, bce_w = weight

    if inputs.shape != targets.shape:
        raise ValueError("inputs and targets must have the same shape")

    total = inputs.size
    flat_p = inputs.reshape(-1)
    flat_t = targets.reshape(-1)

    # Sublane packing by dtype: 8 rows for 4-byte, 16 for 2-byte, 32 for 1-byte.
    itemsize = jnp.dtype(inputs.dtype).itemsize
    rows = {4: 8, 2: 16, 1: 32}.get(int(itemsize), 8)

    # Kernel handles the prefix that is a multiple of rows*128; the tiny remainder
    # (< rows*128 elements) is folded into the JAX finalize below.
    cols = (total // (rows * 128)) * 128
    main = rows * cols
    rem = total - main

    inter = jnp.float32(0.0)
    denom = jnp.float32(0.0)
    bce_sum = jnp.float32(0.0)

    if cols > 0:
        p2 = (flat_p if rem == 0 else flat_p[:main]).reshape(rows, cols)
        t2 = (flat_t if rem == 0 else flat_t[:main]).reshape(rows, cols)

        # Tile width: multiple of 128, never wider than the array.
        tk_i = 128 * max(1, min(int(tk), cols) // 128)
        kblocks = pl.cdiv(cols, tk_i)
        nsplit = _num_parallel_shards() if kblocks >= 2 else 1
        half_blocks = pl.cdiv(kblocks, nsplit)
        need_mask = (nsplit * half_blocks * tk_i) != cols

        # Clamp so the DMA never targets a fully out-of-range block (masking
        # discards any duplicated data).
        def in_idx(s, k):
            return (0, jnp.minimum(s * half_blocks + k, kblocks - 1))

        kernel = partial(
            _dice_bce_kernel,
            cols=cols, tk=tk_i, half_blocks=half_blocks,
            kblocks=kblocks, need_mask=need_mask,
        )

        acc_sds = jax.ShapeDtypeStruct((nsplit * rows, 128), jnp.float32)
        acc_spec = pl.BlockSpec((rows, 128), lambda s, k: (s, 0))

        inter_p, denom_p, bce_p = pl.pallas_call(
            kernel,
            out_shape=(acc_sds, acc_sds, acc_sds),
            grid_spec=pltpu.PrefetchScalarGridSpec(
                num_scalar_prefetch=0,
                grid=(nsplit, half_blocks),
                in_specs=[
                    pl.BlockSpec((rows, tk_i), in_idx),
                    pl.BlockSpec((rows, tk_i), in_idx),
                ],
                out_specs=(acc_spec, acc_spec, acc_spec),
            ),
            compiler_params=pltpu.CompilerParams(
                dimension_semantics=("parallel", "arbitrary"),
                vmem_limit_bytes=32 * 1024 * 1024,
            ),
            cost_estimate=pl.CostEstimate(
                flops=13 * main,
                transcendentals=2 * main,
                bytes_accessed=2 * main * int(itemsize) + 3 * nsplit * rows * 128 * 4,
            ),
        )(p2, t2)

        inter = jnp.sum(inter_p)
        denom = jnp.sum(denom_p)
        bce_sum = -jnp.sum(bce_p)

    if rem > 0:
        pr = flat_p[main:].astype(jnp.float32)
        tr = flat_t[main:].astype(jnp.float32)
        inter = inter + jnp.sum(pr * tr)
        denom = denom + jnp.sum(pr) + jnp.sum(tr)
        log_pr = jnp.maximum(jnp.log(pr), -100.0)
        log_1mpr = jnp.maximum(jnp.log(1.0 - pr), -100.0)
        bce_sum = bce_sum + jnp.sum(-(tr * log_pr + (1.0 - tr) * log_1mpr))

    bce = bce_sum / jnp.float32(total)
    dice_loss = 1.0 - (2.0 * inter + smooth) / (denom + smooth)

    if dice_w and bce_w:
        return bce_w * bce + dice_w * dice_loss
    return bce + dice_loss


def _reference(inputs, targets, smooth=1.0, weight=(1, 0.5)):
    dice_w, bce_w = weight
    p = inputs.reshape(-1).astype(jnp.float32)
    t = targets.reshape(-1).astype(jnp.float32)
    intersection = jnp.sum(p * t)
    dice_loss = 1.0 - (2.0 * intersection + smooth) / (jnp.sum(p) + jnp.sum(t) + smooth)
    log_p = jnp.maximum(jnp.log(p), -100.0)
    log_1mp = jnp.maximum(jnp.log(1.0 - p), -100.0)
    bce = jnp.mean(-(t * log_p + (1.0 - t) * log_1mp))
    if dice_w and bce_w:
        return bce_w * bce + dice_w * dice_loss
    return bce + dice_loss


if __name__ == "__main__":
    key = jax.random.PRNGKey(0)

    def make(shape, dtype, k):
        k1, k2 = jax.random.split(k)
        probs = jax.nn.sigmoid(jax.random.normal(k1, shape, dtype=jnp.float32))
        labels = (jax.random.uniform(k2, shape) > 0.5).astype(jnp.float32)
        return probs.astype(dtype), labels.astype(dtype)

    tests = [
        ((2, 4, 16, 16), jnp.float32, 32768),   # main case (no mask, no remainder)
        ((3, 5, 7, 11), jnp.float32, 32768),    # ragged size -> JAX remainder path
        ((2, 4, 16, 24), jnp.float32, 256),     # small tk -> masked tail tile path
        ((2, 4, 16, 16), jnp.bfloat16, 32768),  # bf16 -> rows=16 sublane packing
    ]

    ok = True
    for i, (shape, dtype, tk) in enumerate(tests):
        key, sub = jax.random.split(key)
        probs, labels = make(shape, dtype, sub)
        out = jax.block_until_ready(dice_bce_loss(probs, labels, tk=tk))
        ref = _reference(probs, labels)
        if not jnp.allclose(out, ref, atol=1e-5, rtol=1e-5):
            ok = False
            print(f"MISMATCH test {i}: kernel={out} ref={ref}")

    if ok:
        print("KERNEL_OK")
</pallas_src>

<mosaic_0001>
module attributes {stable_mosaic.version = 11 : i64} {
  func.func @_dice_bce_kernel(%arg0: i32, %arg1: i32, %arg2: memref<8x256xf32, #tpu.memory_space<vmem>>, %arg3: memref<8x256xf32, #tpu.memory_space<vmem>>, %arg4: memref<8x128xf32, #tpu.memory_space<vmem>>, %arg5: memref<8x128xf32, #tpu.memory_space<vmem>>, %arg6: memref<8x128xf32, #tpu.memory_space<vmem>>) attributes {dimension_semantics = [#tpu.dimension_semantics<parallel>, #tpu.dimension_semantics<arbitrary>], iteration_bounds = array<i64: 1, 1>, scalar_prefetch = 0 : i64, scratch_operands = 0 : i64, tpu.core_type = #tpu.core_type<tc>, window_params = [{transform_indices = @transform_0, window_bounds = array<i64: 8, 256>}, {transform_indices = @transform_1, window_bounds = array<i64: 8, 256>}, {transform_indices = @transform_2, window_bounds = array<i64: 8, 128>}, {transform_indices = @transform_3, window_bounds = array<i64: 8, 128>}, {transform_indices = @transform_4, window_bounds = array<i64: 8, 128>}]} {
    %c0_i32 = arith.constant 0 : i32
    %0 = arith.cmpi eq, %arg1, %c0_i32 : i32
    %1 = arith.extui %0 : i1 to i32
    %c0_i32_0 = arith.constant 0 : i32
    %2 = arith.cmpi ne, %1, %c0_i32_0 : i32
    scf.if %2 {
      %cst_18 = arith.constant 0.000000e+00 : f32
      %36 = vector.broadcast %cst_18 : f32 to vector<8x128xf32>
      %c0_19 = arith.constant 0 : index
      %c0_20 = arith.constant 0 : index
      %37 = vector.load %arg4[%c0_19, %c0_20] : memref<8x128xf32, #tpu.memory_space<vmem>>, vector<8x128xf32>
      tpu.vector_store %arg4[%c0_19, %c0_20], %36 {strides = array<i32>} : memref<8x128xf32, #tpu.memory_space<vmem>>, vector<8x128xf32>,
      %cst_21 = arith.constant 0.000000e+00 : f32
      %38 = vector.broadcast %cst_21 : f32 to vector<8x128xf32>
      %c0_22 = arith.constant 0 : index
      %c0_23 = arith.constant 0 : index
      %39 = vector.load %arg5[%c0_22, %c0_23] : memref<8x128xf32, #tpu.memory_space<vmem>>, vector<8x128xf32>
      tpu.vector_store %arg5[%c0_22, %c0_23], %38 {strides = array<i32>} : memref<8x128xf32, #tpu.memory_space<vmem>>, vector<8x128xf32>,
      %cst_24 = arith.constant 0.000000e+00 : f32
      %40 = vector.broadcast %cst_24 : f32 to vector<8x128xf32>
      %c0_25 = arith.constant 0 : index
      %c0_26 = arith.constant 0 : index
      %41 = vector.load %arg6[%c0_25, %c0_26] : memref<8x128xf32, #tpu.memory_space<vmem>>, vector<8x128xf32>
      tpu.vector_store %arg6[%c0_25, %c0_26], %40 {strides = array<i32>} : memref<8x128xf32, #tpu.memory_space<vmem>>, vector<8x128xf32>,
    } else {
    }
    %c0 = arith.constant 0 : index
    %c0_1 = arith.constant 0 : index
    %3 = vector.load %arg2[%c0, %c0_1] : memref<8x256xf32, #tpu.memory_space<vmem>>, vector<8x256xf32>
    %c0_2 = arith.constant 0 : index
    %c0_3 = arith.constant 0 : index
    %4 = vector.load %arg3[%c0_2, %c0_3] : memref<8x256xf32, #tpu.memory_space<vmem>>, vector<8x256xf32>
    %5 = math.log %3 : vector<8x256xf32>
    %cst = arith.constant -1.000000e+02 : f32
    %6 = vector.broadcast %cst : f32 to vector<8x256xf32>
    %7 = arith.maximumf %5, %6 : vector<8x256xf32>
    %cst_4 = arith.constant 1.000000e+00 : f32
    %8 = vector.broadcast %cst_4 : f32 to vector<8x256xf32>
    %9 = arith.subf %8, %3 : vector<8x256xf32>
    %10 = math.log %9 : vector<8x256xf32>
    %cst_5 = arith.constant -1.000000e+02 : f32
    %11 = vector.broadcast %cst_5 : f32 to vector<8x256xf32>
    %12 = arith.maximumf %10, %11 : vector<8x256xf32>
    %c0_6 = arith.constant 0 : index
    %c0_7 = arith.constant 0 : index
    %13 = vector.load %arg4[%c0_6, %c0_7] : memref<8x128xf32, #tpu.memory_space<vmem>>, vector<8x128xf32>
    %14 = arith.mulf %3, %4 : vector<8x256xf32>
    %15 = vector.extract_strided_slice %14 {offsets = [0, 0], sizes = [8, 128], strides = [1, 1]} : vector<8x256xf32> to vector<8x128xf32>
    %16 = vector.extract_strided_slice %14 {offsets = [0, 128], sizes = [8, 128], strides = [1, 1]} : vector<8x256xf32> to vector<8x128xf32>
    %17 = arith.addf %15, %16 : vector<8x128xf32>
    %18 = arith.addf %13, %17 : vector<8x128xf32>
    %c0_8 = arith.constant 0 : index
    %c0_9 = arith.constant 0 : index
    %19 = vector.load %arg4[%c0_8, %c0_9] : memref<8x128xf32, #tpu.memory_space<vmem>>, vector<8x128xf32>
    tpu.vector_store %arg4[%c0_8, %c0_9], %18 {strides = array<i32>} : memref<8x128xf32, #tpu.memory_space<vmem>>, vector<8x128xf32>,
    %c0_10 = arith.constant 0 : index
    %c0_11 = arith.constant 0 : index
    %20 = vector.load %arg5[%c0_10, %c0_11] : memref<8x128xf32, #tpu.memory_space<vmem>>, vector<8x128xf32>
    %21 = arith.addf %3, %4 : vector<8x256xf32>
    %22 = vector.extract_strided_slice %21 {offsets = [0, 0], sizes = [8, 128], strides = [1, 1]} : vector<8x256xf32> to vector<8x128xf32>
    %23 = vector.extract_strided_slice %21 {offsets = [0, 128], sizes = [8, 128], strides = [1, 1]} : vector<8x256xf32> to vector<8x128xf32>
    %24 = arith.addf %22, %23 : vector<8x128xf32>
    %25 = arith.addf %20, %24 : vector<8x128xf32>
    %c0_12 = arith.constant 0 : index
    %c0_13 = arith.constant 0 : index
    %26 = vector.load %arg5[%c0_12, %c0_13] : memref<8x128xf32, #tpu.memory_space<vmem>>, vector<8x128xf32>
    tpu.vector_store %arg5[%c0_12, %c0_13], %25 {strides = array<i32>} : memref<8x128xf32, #tpu.memory_space<vmem>>, vector<8x128xf32>,
    %c0_14 = arith.constant 0 : index
    %c0_15 = arith.constant 0 : index
    %27 = vector.load %arg6[%c0_14, %c0_15] : memref<8x128xf32, #tpu.memory_space<vmem>>, vector<8x128xf32>
    %28 = arith.subf %7, %12 : vector<8x256xf32>
    %29 = arith.mulf %4, %28 : vector<8x256xf32>
    %30 = arith.addf %12, %29 : vector<8x256xf32>
    %31 = vector.extract_strided_slice %30 {offsets = [0, 0], sizes = [8, 128], strides = [1, 1]} : vector<8x256xf32> to vector<8x128xf32>
    %32 = vector.extract_strided_slice %30 {offsets = [0, 128], sizes = [8, 128], strides = [1, 1]} : vector<8x256xf32> to vector<8x128xf32>
    %33 = arith.addf %31, %32 : vector<8x128xf32>
    %34 = arith.addf %27, %33 : vector<8x128xf32>
    %c0_16 = arith.constant 0 : index
    %c0_17 = arith.constant 0 : index
    %35 = vector.load %arg6[%c0_16, %c0_17] : memref<8x128xf32, #tpu.memory_space<vmem>>, vector<8x128xf32>
    tpu.vector_store %arg6[%c0_16, %c0_17], %34 {strides = array<i32>} : memref<8x128xf32, #tpu.memory_space<vmem>>, vector<8x128xf32>,
    return
  }
  func.func @transform_0(%arg0: i32, %arg1: i32) -> (i32, i32) {
    %c1_i32 = arith.constant 1 : i32
    %0 = arith.muli %arg0, %c1_i32 : i32
    %1 = arith.addi %0, %arg1 : i32
    %c0_i32 = arith.constant 0 : i32
    %2 = arith.minsi %1, %c0_i32 : i32
    %c0_i32_0 = arith.constant 0 : i32
    %c0_i32_1 = arith.constant 0 : i32
    return %c0_i32_0, %2 : i32, i32
  }
  func.func @transform_1(%arg0: i32, %arg1: i32) -> (i32, i32) {
    %c1_i32 = arith.constant 1 : i32
    %0 = arith.muli %arg0, %c1_i32 : i32
    %1 = arith.addi %0, %arg1 : i32
    %c0_i32 = arith.constant 0 : i32
    %2 = arith.minsi %1, %c0_i32 : i32
    %c0_i32_0 = arith.constant 0 : i32
    %c0_i32_1 = arith.constant 0 : i32
    return %c0_i32_0, %2 : i32, i32
  }
  func.func @transform_2(%arg0: i32, %arg1: i32) -> (i32, i32) {
    %c0_i32 = arith.constant 0 : i32
    %c0_i32_0 = arith.constant 0 : i32
    return %arg0, %c0_i32 : i32, i32
  }
  func.func @transform_3(%arg0: i32, %arg1: i32) -> (i32, i32) {
    %c0_i32 = arith.constant 0 : i32
    %c0_i32_0 = arith.constant 0 : i32
    return %arg0, %c0_i32 : i32, i32
  }
  func.func @transform_4(%arg0: i32, %arg1: i32) -> (i32, i32) {
    %c0_i32 = arith.constant 0 : i32
    %c0_i32_0 = arith.constant 0 : i32
    return %arg0, %c0_i32 : i32, i32
  }
}

</mosaic_0001>

<llo_original>
// kernel: dice_bce_loss.1
$region0: #{dice_bce_loss.1}
  #allocation0 [shape = 'u32[]', space=smem, size = 0x4, offset = 0x4, fixed_abs, tag = 'smem constant byte address 0x4 - core index']
  #allocation1 [shape = 'u32[144,128]{1,0:T(1,128)}', space=vmem, size = 0x12000, scoped, tag = 'internal scratch']
  %s0 = inlined_call_operand.vmem [shape: f32[8,256], index: 0, kind: input, shape index: {}]
  %s1 = inlined_call_operand.vmem [shape: f32[8,256], index: 1, kind: input, shape index: {}]
  %s2 = inlined_call_operand.vmem [shape: f32[8,128], index: 2, kind: output, shape index: {0}]
  %s3 = inlined_call_operand.vmem [shape: f32[8,128], index: 3, kind: output, shape index: {1}]
  %s4 = inlined_call_operand.vmem [shape: f32[8,128], index: 4, kind: output, shape index: {2}]
  %5 = xla_tuple %s2, %s3, %s4
  %s6 = sld [smem:[#allocation0]]
  $region38: #{dice_bce_loss.1} parent=0
    _
  %s8 = ssub.s32 1, %s6
  %s9 = scalar_select 0, %s8, %s6
  // Predicated region
  $region2: #{dice_bce_loss.1} parent=0 // pred_check
    _
  $region3: #{dice_bce_loss.1} parent=0 // pred_check_branch
    %11 = sbr.rel (0) target = $region5
  $region4: #{dice_bce_loss.1} parent=0 // pred_region
    %s12 = sadd.s32 0, 0
    %p13 = scmp.lt.s32.totalorder %s12, 0
    %s14 = scalar_select %p13, %s12, 0
    %s15 = smul.u32 2, %s14
    %p16 = scmp.lt.s32.totalorder %s15, 1
    %s17 = scalar_select %p16, %s15, 1
    %s18 = smul.addr %s17, 8
    %s19 = scalar_lea.vmem %s0, %s18
    %s20 = sadd.s32 0, 0
    %p21 = scmp.lt.s32.totalorder %s20, 0
    %s22 = scalar_select %p21, %s20, 0
    %s23 = smul.u32 2, %s22
  $region5: #{dice_bce_loss.1} parent=0 // pred_fallthru
    _
  // Predicated region
  $region6: #{dice_bce_loss.1} parent=0 // pred_check
    _
  $region7: #{dice_bce_loss.1} parent=0 // pred_check_branch
    %25 = sbr.rel (0) target = $region9
  $region8: #{dice_bce_loss.1} parent=0 // pred_region
    %s26 = sadd.s32 0, 0
    %p27 = scmp.lt.s32.totalorder %s26, 0
    %s28 = scalar_select %p27, %s26, 0
    %s29 = smul.u32 2, %s28
    %p30 = scmp.lt.s32.totalorder %s29, 1
    %s31 = scalar_select %p30, %s29, 1
    %s32 = smul.addr %s31, 8
    %s33 = scalar_lea.vmem %s1, %s32
    %s34 = sadd.s32 0, 0
    %p35 = scmp.lt.s32.totalorder %s34, 0
    %s36 = scalar_select %p35, %s34, 0
    %s37 = smul.u32 2, %s36
  $region9: #{dice_bce_loss.1} parent=0 // pred_fallthru
    _
  %s38 = sadd.s32 0, 0
  %p39 = scmp.lt.s32.totalorder %s38, 0
  %s40 = scalar_select %p39, %s38, 0
  %s41 = smul.u32 2, %s40
  %p42 = scmp.lt.s32.totalorder %s41, 1
  %s43 = scalar_select %p42, %s41, 1
  %s44 = smul.addr %s43, 8
  %s45 = scalar_lea.vmem %s0, %s44
  %s46 = sadd.s32 0, 0
  %p47 = scmp.lt.s32.totalorder %s46, 0
  %s48 = scalar_select %p47, %s46, 0
  %s49 = smul.u32 2, %s48
  %p50 = scmp.lt.s32.totalorder %s49, 1
  %s51 = scalar_select %p50, %s49, 1
  %s52 = smul.addr %s51, 8
  %s53 = scalar_lea.vmem %s1, %s52
  %s54 = sadd.s32 0, 0
  %p55 = scmp.lt.s32.totalorder %s54, 0
  %s56 = scalar_select %p55, %s54, 0
  %s57 = smul.u32 2, %s56
  %p58 = scmp.lt.s32.totalorder %s57, 1
  %s59 = scalar_select %p58, %s57, 1
  %s60 = smul.addr %s59, 8
  %s61 = scalar_lea.vmem %s0, %s60
  %s62 = sadd.s32 0, 0
  %p63 = scmp.lt.s32.totalorder %s62, 0
  %s64 = scalar_select %p63, %s62, 0
  %s65 = smul.u32 2, %s64
  %s66 = sadd.s32 0, 0
  %p67 = scmp.lt.s32.totalorder %s66, 0
  %s68 = scalar_select %p67, %s66, 0
  %s69 = smul.u32 2, %s68
  %p70 = scmp.lt.s32.totalorder %s69, 1
  %s71 = scalar_select %p70, %s69, 1
  %s72 = smul.addr %s71, 8
  %s73 = scalar_lea.vmem %s1, %s72
  %s74 = sadd.s32 0, 0
  %p75 = scmp.lt.s32.totalorder %s74, 0
  %s76 = scalar_select %p75, %s74, 0
  %s77 = smul.u32 2, %s76
  %p78 = scmp.eq.s32.totalorder 0, 0
  // Predicated region
  $region10: #{dice_bce_loss.1} parent=0 // pred_check
    %p79 = pneg %p78
  $region11: #{dice_bce_loss.1} parent=0 // pred_check_branch
    %81 = sbr.rel (%p79) target = $region13
  $region12: #{dice_bce_loss.1} parent=0 // pred_region
    %82 = vst [vmem:[%s2] sm:$0xff] 0.0
    %83 = vst [vmem:[%s3] sm:$0xff] 0.0
    %84 = vst [vmem:[%s4] sm:$0xff] 0.0
  $region13: #{dice_bce_loss.1} parent=0 // pred_fallthru
    _
  %v85 = vld [vmem:[%s61] sm:$0xff]
  %v86 = vld [vmem:[%s61 + $0x8] sm:$0xff]
  %v87 = vld [vmem:[%s73] sm:$0xff]
  %v88 = vld [vmem:[%s73 + $0x8] sm:$0xff]
  %v89 = vlog2.pop %v85
  %v90 = vmul.f32 %v89, 0.6931472
  %v91 = vlog2.pop %v86
  %v92 = vmul.f32 %v91, 0.6931472
  %v93 = vmax.f32 %v90, -100.0
  %v94 = vmax.f32 %v92, -100.0
  %v95 = vsub.f32 1.0, %v85
  %v96 = vsub.f32 1.0, %v86
  %v97 = vlog2.pop %v95
  %v98 = vmul.f32 %v97, 0.6931472
  %v99 = vlog2.pop %v96
  %v100 = vmul.f32 %v99, 0.6931472
  %v101 = vmax.f32 %v98, -100.0
  %v102 = vmax.f32 %v100, -100.0
  %v103 = vld [vmem:[%s2] sm:$0xff]
  %v104 = vmul.f32 %v85, %v87
  %v105 = vmul.f32 %v86, %v88
  %v106 = vadd.f32 %v104, %v105
  %v107 = vadd.f32 %v103, %v106
  %108 = vst [vmem:[%s2] sm:$0xff] %v107
  %v109 = vld [vmem:[%s3] sm:$0xff]
  %v110 = vadd.f32 %v85, %v87
  %v111 = vadd.f32 %v86, %v88
  %v112 = vadd.f32 %v110, %v111
  %v113 = vadd.f32 %v109, %v112
  %114 = vst [vmem:[%s3] sm:$0xff] %v113
  %v115 = vld [vmem:[%s4] sm:$0xff]
  %v116 = vsub.f32 %v93, %v101
  %v117 = vsub.f32 %v94, %v102
  %v118 = vmul.f32 %v87, %v116
  %v119 = vmul.f32 %v88, %v117
  %v120 = vadd.f32 %v101, %v118
  %v121 = vadd.f32 %v102, %v119
  %v122 = vadd.f32 %v120, %v121
  %v123 = vadd.f32 %v115, %v122
  %124 = vst [vmem:[%s4] sm:$0xff] %v123
  // Predicated region
  $region14: #{dice_bce_loss.1} parent=0 // pred_check
    _
  $region15: #{dice_bce_loss.1} parent=0 // pred_check_branch
    %126 = sbr.rel (0) target = $region17
  $region16: #{dice_bce_loss.1} parent=0 // pred_region
    _
  $region17: #{dice_bce_loss.1} parent=0 // pred_fallthru
    _
  // Predicated region
  $region18: #{dice_bce_loss.1} parent=0 // pred_check
    _
  $region19: #{dice_bce_loss.1} parent=0 // pred_check_branch
    %128 = sbr.rel (0) target = $region21
  $region20: #{dice_bce_loss.1} parent=0 // pred_region
    _
  $region21: #{dice_bce_loss.1} parent=0 // pred_fallthru
    _
  // Predicated region
  $region22: #{dice_bce_loss.1} parent=0 // pred_check
    _
  $region23: #{dice_bce_loss.1} parent=0 // pred_check_branch
    %130 = sbr.rel (0) target = $region25
  $region24: #{dice_bce_loss.1} parent=0 // pred_region
    _
  $region25: #{dice_bce_loss.1} parent=0 // pred_fallthru
    _
  // Predicated region
  $region26: #{dice_bce_loss.1} parent=0 // pred_check
    _
  $region27: #{dice_bce_loss.1} parent=0 // pred_check_branch
    %132 = sbr.rel (0) target = $region29
  $region28: #{dice_bce_loss.1} parent=0 // pred_region
    _
  $region29: #{dice_bce_loss.1} parent=0 // pred_fallthru
    _
  // Predicated region
  $region30: #{dice_bce_loss.1} parent=0 // pred_check
    _
  $region31: #{dice_bce_loss.1} parent=0 // pred_check_branch
    %134 = sbr.rel (0) target = $region33
  $region32: #{dice_bce_loss.1} parent=0 // pred_region
    _
  $region33: #{dice_bce_loss.1} parent=0 // pred_fallthru
    _
  // Predicated region
  $region34: #{dice_bce_loss.1} parent=0 // pred_check
    _
  $region35: #{dice_bce_loss.1} parent=0 // pred_check_branch
    %136 = sbr.rel (0) target = $region37
  $region36: #{dice_bce_loss.1} parent=0 // pred_region
    _
  $region37: #{dice_bce_loss.1} parent=0 // pred_fallthru
    _

</llo_original>
